<compile_context>
chip_gen: v7x
topology: tpu7x:2x2x1
jax: 0.10.0
libtpu: 0.0.40
codegen_flags: <defaults>
</compile_context>

<pallas_src>
import functools

import jax
import jax.numpy as jnp
from jax.experimental import pallas as pl
from jax.experimental.pallas import tpu as pltpu


# ----------------------------------------------------------------------------
# Kernel: one M-tile of   out = patches @ W + (pos + bias)
# ----------------------------------------------------------------------------
def patch_embed_kernel(x_ref, w_ref, pos_ref, o_ref):
    # x_ref:   (tile_m, K)       patch rows (f32 or bf16)
    # w_ref:   (K, D_pad)        projection weight (resident across the grid)
    # pos_ref: (tile_m, D_pad)   f32 position embedding with conv bias folded in
    # o_ref:   (tile_m, D_pad)   lane-dense output tile
    proj = jnp.dot(x_ref[...], w_ref[...], preferred_element_type=jnp.float32)
    o_ref[...] = (proj + pos_ref[...]).astype(o_ref.dtype)


# ----------------------------------------------------------------------------
# Plain-JAX layout glue
# ----------------------------------------------------------------------------
def patchify_2d(x, patch_size):
    """(B, C, H, W) -> (B*N, C*p*p) with feature order (c, i, j) matching OIHW."""
    B, C, H, W = x.shape
    p = patch_size
    hp, wp = H // p, W // p
    x = x.reshape(B, C, hp, p, wp, p)
    x = jnp.transpose(x, (0, 2, 4, 1, 3, 5))          # (B, hp, wp, C, p, p)
    return x.reshape(B * hp * wp, C * p * p)


def _pad_last(a, mult):
    pad = (-a.shape[-1]) % mult
    if pad == 0:
        return a
    widths = [(0, 0)] * (a.ndim - 1) + [(0, pad)]
    return jnp.pad(a, widths)


def _pick_tile_m(M, N, K, D_pad, in_bytes, out_bytes,
                 vmem_budget=10 * 1024 * 1024, max_rows=512):
    """Largest row-tile that (a) divides M, (b) aligns with the per-image patch
    count N so the position embedding can be block-indexed, (c) is a multiple
    of 8 (sublane), and (d) keeps double-buffered VMEM use under a budget that
    fits the default scoped limits of v5e (16 MiB) / v6e / v7x (32 MiB)."""
    fixed = 2 * K * D_pad * in_bytes                              # resident weight
    per_row = 2 * (K * in_bytes + D_pad * out_bytes) + 2 * D_pad * 4  # x/out streams + pos
    cap = (vmem_budget - fixed) // per_row
    cap = int(min(cap, max_rows))
    if cap < 8:
        return None
    best = None
    for t in range(8, min(M, cap) + 1, 8):
        if M % t == 0 and (t % N == 0 or N % t == 0):
            best = t
    return best


# ----------------------------------------------------------------------------
# Forward
# ----------------------------------------------------------------------------
def base_patch_embedder_forward(x, conv_w, conv_b, pos_emb, *, n_patch,
                                compute_dtype=None):
    """x: (B, C, H, W) NCHW.  Returns (B, N_patches, n_dim), same as the module."""
    B, C, H, W = x.shape
    if H % n_patch or W % n_patch:
        raise ValueError("H and W must be exact multiples of n_patch")
    D = conv_w.shape[0]
    N = (H // n_patch) * (W // n_patch)
    K = C * n_patch * n_patch
    M = B * N
    out_dtype = x.dtype
    cdt = compute_dtype if compute_dtype is not None else x.dtype

    # Layout prep.  K is left unpadded: the kernel block spans the full K axis,
    # which is legal regardless of alignment and avoids shipping zeros over HBM.
    patches = patchify_2d(x, n_patch).astype(cdt)                     # (M, K)

    w_mat = _pad_last(conv_w.reshape(D, K).T, 128).astype(cdt)        # (K, D_pad)
    D_pad = w_mat.shape[-1]

    # Fold the conv bias into the position embedding (exact in f32).
    pos_pb = _pad_last((pos_emb + conv_b[None, :]).astype(jnp.float32), 128)  # (N, D_pad)

    # Tile the collapsed M = B*N dimension.
    tile_m = _pick_tile_m(M, N, K, D_pad,
                          jnp.dtype(cdt).itemsize, jnp.dtype(out_dtype).itemsize)
    if tile_m is None:
        # Fallback: single full-M block (always legal; only suboptimal for huge
        # B*N with a ragged N that has no 8-aligned divisor).
        tile_m = M

    if tile_m % N == 0:
        # A tile covers >= 1 whole image(s): pre-tile pos to tile_m rows (resident).
        pos_arr = jnp.tile(pos_pb, (tile_m // N, 1))                  # (tile_m, D_pad)
        pos_index = lambda i: (0, 0)
    else:
        # N % tile_m == 0: tiles never cross an image boundary.
        pos_arr = pos_pb                                              # (N, D_pad)
        blocks_per_image = N // tile_m
        pos_index = lambda i: (i % blocks_per_image, 0)

    grid = (M // tile_m,)
    # NOTE: per-tile compute (tile_m x K x D_pad matmul) comfortably covers the
    # HBM fetch; bump in_specs[0] to pipeline_mode=pl.Buffered(3) only if a
    # trace shows exposed DMA with small tiles.
    out = pl.pallas_call(
        patch_embed_kernel,
        out_shape=jax.ShapeDtypeStruct((M, D_pad), out_dtype),
        grid_spec=pltpu.PrefetchScalarGridSpec(
            num_scalar_prefetch=0,
            grid=grid,
            in_specs=[
                pl.BlockSpec((tile_m, K), lambda i: (i, 0)),
                pl.BlockSpec((K, D_pad), lambda i: (0, 0)),
                pl.BlockSpec((tile_m, D_pad), pos_index),
            ],
            out_specs=pl.BlockSpec((tile_m, D_pad), lambda i: (i, 0)),
        ),
        compiler_params=pltpu.CompilerParams(
            dimension_semantics=("parallel",),
            allow_input_fusion=[True, False, False],
        ),
    )(patches, w_mat, pos_arr)

    # Identity slice (free) when n_dim is already a multiple of 128.
    return out[:, :D].reshape(B, N, D)


# ----------------------------------------------------------------------------
# Pure-JAX reference (Conv2d stride==kernel + flatten + transpose + pos)
# ----------------------------------------------------------------------------
def reference_forward(x, conv_w, conv_b, pos_emb, *, n_patch):
    embs = jax.lax.conv_general_dilated(
        x, conv_w,
        window_strides=(n_patch, n_patch),
        padding="VALID",
        dimension_numbers=("NCHW", "OIHW", "NCHW"),
    ) + conv_b[None, :, None, None]
    B, D, hp, wp = embs.shape
    embs = embs.reshape(B, D, hp * wp)            # flatten(start_dim=2)
    embs = jnp.transpose(embs, (0, 2, 1))         # transpose(-1, -2)
    return embs + pos_emb                         # broadcast over batch


if __name__ == "__main__":
    image_size = 16
    n_channel = 4
    n_patch = 4
    n_dim = 32
    batch = 2
    N_patches = (image_size // n_patch) ** 2      # 16

    key = jax.random.PRNGKey(0)
    kx, kw, kb, kp = jax.random.split(key, 4)

    x = jax.random.normal(kx, (batch, n_channel, image_size, image_size), jnp.float32)
    conv_w = jax.random.normal(kw, (n_dim, n_channel, n_patch, n_patch), jnp.float32) * 0.05
    conv_b = jax.random.normal(kb, (n_dim,), jnp.float32) * 0.05
    pos_emb = jax.random.normal(kp, (N_patches, n_dim), jnp.float32)

    ref = reference_forward(x, conv_w, conv_b, pos_emb, n_patch=n_patch)

    # f32 path: exact numerics vs the Conv2d reference.
    fwd_f32 = jax.jit(functools.partial(base_patch_embedder_forward, n_patch=n_patch))
    out = jax.block_until_ready(fwd_f32(x, conv_w, conv_b, pos_emb))
    assert out.shape == (batch, N_patches, n_dim), out.shape
    assert jnp.allclose(out, ref, atol=1e-4, rtol=1e-4), float(jnp.max(jnp.abs(out - ref)))

    # bf16 MXU path (deployment config for v6e/v7x): bf16 operands, f32 accumulate,
    # f32 bias/pos add, f32 output -> only bf16 input-rounding error remains.
    fwd_bf16 = jax.jit(functools.partial(base_patch_embedder_forward, n_patch=n_patch,
                                         compute_dtype=jnp.bfloat16))
    out_bf = jax.block_until_ready(fwd_bf16(x, conv_w, conv_b, pos_emb))
    assert out_bf.shape == (batch, N_patches, n_dim), out_bf.shape
    assert jnp.allclose(out_bf, ref, atol=2e-2, rtol=2e-2), float(jnp.max(jnp.abs(out_bf - ref)))

    print("KERNEL_OK")
</pallas_src>

<mosaic_0001>
module attributes {stable_mosaic.version = 11 : i64} {
  func.func @patch_embed_kernel(%arg0: i32, %arg1: memref<32x64xf32, #tpu.memory_space<vmem>>, %arg2: memref<64x128xf32, #tpu.memory_space<vmem>>, %arg3: memref<32x128xf32, #tpu.memory_space<vmem>>, %arg4: memref<32x128xf32, #tpu.memory_space<vmem>>) attributes {dimension_semantics = [#tpu.dimension_semantics<parallel>], iteration_bounds = array<i64: 1>, scalar_prefetch = 0 : i64, scratch_operands = 0 : i64, tpu.core_type = #tpu.core_type<tc>, window_params = [{transform_indices = @transform_0, window_bounds = array<i64: 32, 64>}, {pipeline_mode = #tpu.pipeline_mode<synchronous>, transform_indices = @transform_1, window_bounds = array<i64: 64, 128>}, {pipeline_mode = #tpu.pipeline_mode<synchronous>, transform_indices = @transform_2, window_bounds = array<i64: 32, 128>}, {transform_indices = @transform_3, window_bounds = array<i64: 32, 128>}]} {
    %c0 = arith.constant 0 : index
    %c0_0 = arith.constant 0 : index
    %0 = vector.load %arg1[%c0, %c0_0] : memref<32x64xf32, #tpu.memory_space<vmem>>, vector<32x64xf32>
    %c0_1 = arith.constant 0 : index
    %c0_2 = arith.constant 0 : index
    %1 = vector.load %arg2[%c0_1, %c0_2] : memref<64x128xf32, #tpu.memory_space<vmem>>, vector<64x128xf32>
    %cst = arith.constant dense<0.000000e+00> : vector<32x128xf32>
    %2 = tpu.matmul %0, %1, %cst {dimension_numbers = #tpu.dot_dimension_numbers<[1], [0], [0], [1], [0, 0, 1, 1], [], []>} : vector<32x64xf32>, vector<64x128xf32>, vector<32x128xf32> -> vector<32x128xf32>
    %c0_3 = arith.constant 0 : index
    %c0_4 = arith.constant 0 : index
    %3 = vector.load %arg3[%c0_3, %c0_4] : memref<32x128xf32, #tpu.memory_space<vmem>>, vector<32x128xf32>
    %4 = arith.addf %2, %3 : vector<32x128xf32>
    %c0_5 = arith.constant 0 : index
    %c0_6 = arith.constant 0 : index
    %5 = vector.load %arg4[%c0_5, %c0_6] : memref<32x128xf32, #tpu.memory_space<vmem>>, vector<32x128xf32>
    tpu.vector_store %arg4[%c0_5, %c0_6], %4 {strides = array<i32>} : memref<32x128xf32, #tpu.memory_space<vmem>>, vector<32x128xf32>,
    return
  }
  func.func @transform_0(%arg0: i32) -> (i32, i32) {
    %c0_i32 = arith.constant 0 : i32
    %c0_i32_0 = arith.constant 0 : i32
    return %arg0, %c0_i32 : i32, i32
  }
  func.func @transform_1(%arg0: i32) -> (i32, i32) {
    %c0_i32 = arith.constant 0 : i32
    %c0_i32_0 = arith.constant 0 : i32
    %c0_i32_1 = arith.constant 0 : i32
    return %c0_i32, %c0_i32_0 : i32, i32
  }
  func.func @transform_2(%arg0: i32) -> (i32, i32) {
    %c0_i32 = arith.constant 0 : i32
    %c0_i32_0 = arith.constant 0 : i32
    %c0_i32_1 = arith.constant 0 : i32
    return %c0_i32, %c0_i32_0 : i32, i32
  }
  func.func @transform_3(%arg0: i32) -> (i32, i32) {
    %c0_i32 = arith.constant 0 : i32
    %c0_i32_0 = arith.constant 0 : i32
    return %arg0, %c0_i32 : i32, i32
  }
}

</mosaic_0001>

<llo_original>
// kernel: base_patch_embedder_forward.1
$region0: #{base_patch_embedder_forward.1}
  #allocation0 [shape = 'u32[]', space=smem, size = 0x4, offset = 0x4, fixed_abs, tag = 'smem constant byte address 0x4 - core index']
  #allocation1 [shape = 'u32[144,128]{1,0:T(1,128)}', space=vmem, size = 0x12000, scoped, tag = 'internal scratch']
  %s0 = inlined_call_operand.vmem [shape: f32[32,64], index: 0, kind: input, shape index: {}]
  %s1 = inlined_call_operand.vmem [shape: f32[64,128], index: 1, kind: input, shape index: {}]
  %s2 = inlined_call_operand.vmem [shape: f32[32,128], index: 2, kind: input, shape index: {}]
  %s3 = inlined_call_operand.hbm [shape: f32[32,128], index: 3, kind: output, shape index: {}]
  %s4 = sld [smem:[#allocation0]]
  $region22: #{base_patch_embedder_forward.1} parent=0
    _
  %s6 = ssub.s32 1, %s4
  %s7 = scalar_select 0, %s6, %s4
  $region1: #{base_patch_embedder_forward.1} parent=0
    #allocation2 [shape = 'u8[16384]{0}', space=vmem, size = 0x4000, scoped, tag = 'output window, operand 0, single buffered']
    #allocation3 [shape = 's32[1]{0}', space=sflag, size = 0x4, scoped, tag = 'scoped memory for base_patch_embedder_forward.1']
    %8 = vsyncpa [#allocation3], 0
    // Predicated region
    $region2: #{base_patch_embedder_forward.1} parent=1 // pred_check
      _
    $region3: #{base_patch_embedder_forward.1} parent=1 // pred_check_branch
      %10 = sbr.rel (0) target = $region5
    $region4: #{base_patch_embedder_forward.1} parent=1 // pred_region
      _
    $region5: #{base_patch_embedder_forward.1} parent=1 // pred_fallthru
      _
    // Predicated region
    $region6: #{base_patch_embedder_forward.1} parent=1 // pred_check
      _
    $region7: #{base_patch_embedder_forward.1} parent=1 // pred_check_branch
      %12 = sbr.rel (0) target = $region9
    $region8: #{base_patch_embedder_forward.1} parent=1 // pred_region
      _
    $region9: #{base_patch_embedder_forward.1} parent=1 // pred_fallthru
      _
    // Predicated region
    $region10: #{base_patch_embedder_forward.1} parent=1 // pred_check
      _
    $region11: #{base_patch_embedder_forward.1} parent=1 // pred_check_branch
      %14 = sbr.rel (0) target = $region13
    $region12: #{base_patch_embedder_forward.1} parent=1 // pred_region
      _
    $region13: #{base_patch_embedder_forward.1} parent=1 // pred_fallthru
      _
    %v15 = vld [vmem:[%s0] sm:$0xff]
    %v16 = vld [vmem:[%s0 + $0x8] sm:$0xff]
    %v17 = vld [vmem:[%s0 + $0x10] sm:$0xff]
    %v18 = vld [vmem:[%s0 + $0x18] sm:$0xff]
    %v19 = vld [vmem:[%s1] sm:$0xff]
    %v20 = vld [vmem:[%s1 + $0x8] sm:$0xff]
    %v21 = vld [vmem:[%s1 + $0x10] sm:$0xff]
    %v22 = vld [vmem:[%s1 + $0x18] sm:$0xff]
    %v23 = vld [vmem:[%s1 + $0x20] sm:$0xff]
    %v24 = vld [vmem:[%s1 + $0x28] sm:$0xff]
    %v25 = vld [vmem:[%s1 + $0x30] sm:$0xff]
    %v26 = vld [vmem:[%s1 + $0x38] sm:$0xff]
    %v27 = vld [vmem:[%s2] sm:$0xff]
    %v28 = vld [vmem:[%s2 + $0x8] sm:$0xff]
    %v29 = vld [vmem:[%s2 + $0x10] sm:$0xff]
    %v30 = vld [vmem:[%s2 + $0x18] sm:$0xff]
    %vm31 = vcmask 523264
    %v33 = vsel %vm31, %v15, 0
    %v36 = vsel %vm31, %v16, 0
    %v39 = vsel %vm31, %v17, 0
    %v42 = vsel %vm31, %v18, 0
    %44 = vmatprep.subr.mxu0 0.0
    %45 = vmatpush1.msra.mxu0 %v19
    %46 = vmatprep.subr.mxu0 0.0
    %47 = vmatpush1.msra.mxu0 %v20
    %48 = vmatprep.subr.mxu0 0.0
    %49 = vmatpush1.msra.mxu0 %v21
    %50 = vmatprep.subr.mxu0 0.0
    %51 = vmatpush1.msra.mxu0 %v22
    %52 = vmatprep.subr.mxu0 0.0
    %53 = vmatpush1.msra.mxu0 %v23
    %54 = vmatprep.subr.mxu0 0.0
    %55 = vmatpush1.msra.mxu0 %v24
    %56 = vmatprep.subr.mxu0 0.0
    %57 = vmatpush1.msra.mxu0 %v25
    %58 = vmatprep.subr.mxu0 0.0
    %59 = vmatpush1.msra.mxu0 %v26
    %60 = vmatprep.subr.mxu0 0.0
    %61 = vmatpush1.msra.mxu0 0.0
    %62 = vmatprep.subr.mxu0 0.0
    %63 = vmatpush1.msra.mxu0 0.0
    %64 = vmatprep.subr.mxu0 0.0
    %65 = vmatpush1.msra.mxu0 0.0
    %66 = vmatprep.subr.mxu0 0.0
    %67 = vmatpush1.msra.mxu0 0.0
    %68 = vmatprep.subr.mxu0 0.0
    %69 = vmatpush1.msra.mxu0 0.0
    %70 = vmatprep.subr.mxu0 0.0
    %71 = vmatpush1.msra.mxu0 0.0
    %72 = vmatprep.subr.mxu0 0.0
    %73 = vmatpush1.msra.mxu0 0.0
    %74 = vmatprep.subr.mxu0 0.0
    %75 = vmatpush1.msra.mxu0 0.0
    %76 = vmatprep.subr.mxu0 0.0
    %77 = vmatpush1.msra.mxu0 0.0
    %78 = vmatprep.subr.mxu0 0.0
    %79 = vmatpush1.msra.mxu0 0.0
    %80 = vmatprep.subr.mxu0 0.0
    %81 = vmatpush1.msra.mxu0 0.0
    %82 = vmatprep.subr.mxu0 0.0
    %83 = vmatpush1.msra.mxu0 0.0
    %84 = vmatprep.subr.mxu0 0.0
    %85 = vmatpush1.msra.mxu0 0.0
    %86 = vmatprep.subr.mxu0 0.0
    %87 = vmatpush1.msra.mxu0 0.0
    %88 = vmatprep.subr.mxu0 0.0
    %89 = vmatpush1.msra.mxu0 0.0
    %90 = vmatprep.subr.mxu0 0.0
    %91 = vmatpush1.msra.mxu0 0.0
    %92 = vmatprep.subr.mxu0 0.0
    %93 = vmatpush1.msra.mxu0 0.0
    %94 = vmatprep.subr.mxu0 0.0
    %95 = vmatpush1.msra.mxu0 0.0
    %96 = vmatprep.subr.mxu0 0.0
    %97 = vmatpush1.msra.mxu0 0.0
    %98 = vmatprep.subr.mxu0 0.0
    %99 = vmatpush1.msra.mxu0 0.0
    %100 = vmatprep.subr.mxu0 0.0
    %101 = vmatpush1.msra.mxu0 0.0
    %102 = vmatprep.subr.mxu0 0.0
    %103 = vmatpush1.msra.mxu0 0.0
    %104 = vmatprep.subr.mxu0 0.0
    %105 = vmatpush1.msra.mxu0 0.0
    %106 = vmatprep.subr.mxu0 0.0
    %107 = vmatpush1.msra.mxu0 0.0
    %108 = vmatprep.mubr.f32.mxu0 0.0
    %109 = vmatmul.mubr.f32.gmra.mrb[0].mxu0 %v33
    %v110 = vpop.f32.mrb[0].mxu0
    %v111 = vadd.f32 %v27, %v110
    %v112 = vpop.f32.mrb[0].mxu0
    %113 = vmatprep.mubr.f32.mxu0 0.0
    %114 = vmatmul.mubr.f32.gmra.mrb[0].mxu0 %v36
    %v115 = vpop.f32.mrb[0].mxu0
    %v116 = vadd.f32 %v28, %v115
    %v117 = vpop.f32.mrb[0].mxu0
    %118 = vmatprep.mubr.f32.mxu0 0.0
    %119 = vmatmul.mubr.f32.gmra.mrb[0].mxu0 %v39
    %v120 = vpop.f32.mrb[0].mxu0
    %v121 = vadd.f32 %v29, %v120
    %v122 = vpop.f32.mrb[0].mxu0
    %123 = vmatprep.mubr.f32.mxu0 0.0
    %124 = vmatmul.mubr.f32.gmra.mrb[0].mxu0 %v42
    %v125 = vpop.f32.mrb[0].mxu0
    %v126 = vadd.f32 %v30, %v125
    %v127 = vpop.f32.mrb[0].mxu0
    %128 = vdwg.mxu0
    %129 = vst [vmem:[#allocation2] sm:$0xff] %v111
    %130 = vst [vmem:[#allocation2 + $0x8] sm:$0xff] %v116
    %131 = vst [vmem:[#allocation2 + $0x10] sm:$0xff] %v121
    %132 = vst [vmem:[#allocation2 + $0x18] sm:$0xff] %v126
    // Predicated region
    $region14: #{base_patch_embedder_forward.1} parent=1 // pred_check
      _
    $region15: #{base_patch_embedder_forward.1} parent=1 // pred_check_branch
      %134 = sbr.rel (0) target = $region17
    $region16: #{base_patch_embedder_forward.1} parent=1 // pred_region
      %s136 = ssub.s32 512, 512
      %137 = vsyncadd [#allocation3], %s136
      %s138 = sshll.u32 [#allocation2], 4
      %s139 = int_to_ptr.vmem [resolvable:$true] %s138
      %144 = dma.vmem_to_hbm [thread:$0]  %s139, 512, %s3, [#allocation3], 128, 128, 8
    $region17: #{base_patch_embedder_forward.1} parent=1 // pred_fallthru
      _
    // Predicated region
    $region18: #{base_patch_embedder_forward.1} parent=1 // pred_check
      _
    $region19: #{base_patch_embedder_forward.1} parent=1 // pred_check_branch
      %146 = sbr.rel (0) target = $region21
    $region20: #{base_patch_embedder_forward.1} parent=1 // pred_region
      %147 = dma.done [#allocation3], 512
    $region21: #{base_patch_embedder_forward.1} parent=1 // pred_fallthru
      _
    %148 = vsyncpa [#allocation3], 1

</llo_original>
